<compile_context>
chip_gen: v7x
topology: tpu7x:2x2x1
jax: 0.10.0
libtpu: 0.0.40
codegen_flags: <defaults>
</compile_context>

<pallas_src>
import functools

import jax
import jax.numpy as jnp
from jax.experimental import pallas as pl
from jax.experimental.pallas import tpu as pltpu


def _round_up(v: int, m: int) -> int:
    return ((v + m - 1) // m) * m


# ----------------------------------------------------------------------------
# Fused Pallas kernel: all GCN layers + final ReLU in one call.
#   refs = (a_ref, x_ref, w0_ref, ..., wL_ref, o_ref)
# ----------------------------------------------------------------------------
def _fused_gcn_kernel(*refs, negative_slope, aggregate_first):
    a_ref, x_ref = refs[0], refs[1]
    w_refs = refs[2:-1]
    o_ref = refs[-1]

    a = a_ref[...]                      # (Np, Np)  bf16, normalised adjacency
    h = x_ref[...]                      # (Np, F0p) bf16, node features
    n_layers = len(w_refs)

    for li, w_ref in enumerate(w_refs):
        w = w_ref[...]                  # (Fip, Fop) bf16
        if aggregate_first[li]:
            # (Â @ H) @ W  — N² matmul over the smaller (input) feature dim.
            ah = jnp.dot(a, h, preferred_element_type=jnp.float32)
            z = jnp.dot(ah.astype(jnp.bfloat16), w,
                        preferred_element_type=jnp.float32)
        else:
            # Â @ (H @ W)  — N² matmul over the smaller (output) feature dim.
            hw = jnp.dot(h, w, preferred_element_type=jnp.float32)
            z = jnp.dot(a, hw.astype(jnp.bfloat16),
                        preferred_element_type=jnp.float32)

        if li == n_layers - 1:
            # relu(leaky_relu(z)) == relu(z): single VPU pass on the last layer.
            o_ref[...] = jnp.maximum(z, 0.0).astype(o_ref.dtype)
        else:
            z = jnp.where(z >= 0.0, z, negative_slope * z)   # LeakyReLU(0.3)
            # Dropout is the identity in eval mode.
            # TODO(synk): training-mode dropout (random mask) not implemented.
            h = z.astype(jnp.bfloat16)


# ----------------------------------------------------------------------------
# Plain-JAX glue: normalised adjacency + deterministic parameter init
# ----------------------------------------------------------------------------
def build_norm_adj(edge_index, num_nodes):
    """Â = D^{-1/2} (A + I) D^{-1/2}, A[dst, src] = 1 for each edge src->dst."""
    src = edge_index[0]
    dst = edge_index[1]
    a = jnp.zeros((num_nodes, num_nodes), jnp.float32)
    a = a.at[dst, src].add(1.0)
    a = a + jnp.eye(num_nodes, dtype=jnp.float32)
    deg = a.sum(axis=1)
    d_inv_sqrt = jnp.where(deg > 0.0, deg ** -0.5, 0.0)
    return d_inv_sqrt[:, None] * a * d_inv_sqrt[None, :]


def init_gnn_params(key, x_dim, layer_sizes):
    """Glorot-style deterministic init of GCNConv weights, shape (in, out)."""
    sizes = [x_dim] + list(layer_sizes)
    weights = []
    for fin, fout in zip(sizes[:-1], sizes[1:]):
        key, sub = jax.random.split(key)
        limit = jnp.sqrt(6.0 / (fin + fout))
        weights.append(
            jax.random.uniform(sub, (fin, fout), jnp.float32, -limit, limit)
        )
    return weights


# ----------------------------------------------------------------------------
# Wrapper: pad to lane-aligned shapes, run one fused pallas_call, slice back.
# ----------------------------------------------------------------------------
def gnn_network_forward(x, edge_index, weights, *, negative_slope=0.3):
    """Forward pass of GNN_network (Conv='GCN', bias=False, eval mode)."""
    n = x.shape[0]
    if not weights:                      # empty Sequential -> just .relu()
        return jnp.maximum(x.astype(jnp.float32), 0.0)

    a_hat = build_norm_adj(edge_index, n)

    # Pad node count and every feature dim to lane-dense multiples of 128.
    n_pad = _round_up(n, 128)
    dims = [x.shape[1]] + [w.shape[1] for w in weights]
    dims_pad = [_round_up(d, 128) for d in dims]

    a_p = jnp.zeros((n_pad, n_pad), jnp.bfloat16)
    a_p = a_p.at[:n, :n].set(a_hat.astype(jnp.bfloat16))
    x_p = jnp.zeros((n_pad, dims_pad[0]), jnp.bfloat16)
    x_p = x_p.at[:n, :x.shape[1]].set(x.astype(jnp.bfloat16))

    w_p = []
    aggregate_first = []
    for li, w in enumerate(weights):
        fi, fo = w.shape
        fip, fop = dims_pad[li], dims_pad[li + 1]
        wp = jnp.zeros((fip, fop), jnp.bfloat16)
        wp = wp.at[:fi, :fo].set(w.astype(jnp.bfloat16))
        w_p.append(wp)
        # N² matmul should contract over the smaller (padded) feature dim.
        aggregate_first.append(fip < fop)

    # Advisory cost estimate (padded dims; bf16 in, f32 out).
    flops = 0
    bytes_accessed = a_p.size * 2 + x_p.size * 2 + n_pad * dims_pad[-1] * 4
    for li in range(len(weights)):
        fip, fop = dims_pad[li], dims_pad[li + 1]
        flops += 2 * n_pad * fip * fop + 2 * n_pad * n_pad * min(fip, fop)
        bytes_accessed += fip * fop * 2

    kernel = functools.partial(
        _fused_gcn_kernel,
        negative_slope=negative_slope,
        aggregate_first=tuple(aggregate_first),
    )

    in_specs = [
        pl.BlockSpec((n_pad, n_pad), lambda i: (0, 0)),          # Â
        pl.BlockSpec((n_pad, dims_pad[0]), lambda i: (0, 0)),    # X
    ]
    for li in range(len(weights)):
        fip, fop = dims_pad[li], dims_pad[li + 1]
        in_specs.append(pl.BlockSpec((fip, fop), lambda i: (0, 0)))  # W_l

    out_p = pl.pallas_call(
        kernel,
        out_shape=jax.ShapeDtypeStruct((n_pad, dims_pad[-1]), jnp.float32),
        grid=(1,),
        in_specs=in_specs,
        out_specs=pl.BlockSpec((n_pad, dims_pad[-1]), lambda i: (0, 0)),
        compiler_params=pltpu.CompilerParams(
            dimension_semantics=("arbitrary",),
        ),
        cost_estimate=pl.CostEstimate(
            flops=int(flops),
            transcendentals=0,
            bytes_accessed=int(bytes_accessed),
        ),
    )(a_p, x_p, *w_p)

    return out_p[:n, :weights[-1].shape[1]]


# ----------------------------------------------------------------------------
# Reference (pure JAX, f32) for a sanity check
# ----------------------------------------------------------------------------
def gnn_network_reference(x, edge_index, weights, *, negative_slope=0.3):
    a_hat = build_norm_adj(edge_index, x.shape[0])
    h = x.astype(jnp.float32)
    for w in weights:
        h = a_hat @ (h @ w)
        h = jnp.where(h >= 0.0, h, negative_slope * h)
    return jnp.maximum(h, 0.0)


if __name__ == "__main__":
    key = jax.random.PRNGKey(0)

    # Small synthetic graph: 16 nodes, 32 input features, hidden sizes [64, 48]
    num_nodes = 16
    x_dim = 32
    layer_sizes = [64, 48]
    num_edges = 40

    k_x, k_e, k_w = jax.random.split(key, 3)
    x = jax.random.normal(k_x, (num_nodes, x_dim), jnp.float32)
    edge_index = jax.random.randint(k_e, (2, num_edges), 0, num_nodes,
                                    dtype=jnp.int32)
    weights = init_gnn_params(k_w, x_dim, layer_sizes)

    out = gnn_network_forward(x, edge_index, weights)
    out = jax.block_until_ready(out)

    ref = gnn_network_reference(x, edge_index, weights)
    assert out.shape == (num_nodes, layer_sizes[-1])
    # Tolerance relaxed vs. the pure-f32 reference because the kernel feeds the
    # MXU bf16 inputs (f32 accumulation); expected relative error ~1e-2.
    assert jnp.allclose(out, ref, atol=8e-2, rtol=5e-2), (
        float(jnp.max(jnp.abs(out - ref)))
    )

    print("KERNEL_OK")
</pallas_src>

<mosaic_0001>
module attributes {stable_mosaic.version = 11 : i64} {
  func.func @_fused_gcn_kernel(%arg0: i32, %arg1: memref<128x128xbf16, #tpu.memory_space<vmem>>, %arg2: memref<128x128xbf16, #tpu.memory_space<vmem>>, %arg3: memref<128x128xbf16, #tpu.memory_space<vmem>>, %arg4: memref<128x128xbf16, #tpu.memory_space<vmem>>, %arg5: memref<128x128xf32, #tpu.memory_space<vmem>>) attributes {dimension_semantics = [#tpu.dimension_semantics<arbitrary>], iteration_bounds = array<i64: 1>, scalar_prefetch = 0 : i64, scratch_operands = 0 : i64, tpu.core_type = #tpu.core_type<tc>, window_params = [{pipeline_mode = #tpu.pipeline_mode<synchronous>, transform_indices = @transform_0, window_bounds = array<i64: 128, 128>}, {pipeline_mode = #tpu.pipeline_mode<synchronous>, transform_indices = @transform_1, window_bounds = array<i64: 128, 128>}, {pipeline_mode = #tpu.pipeline_mode<synchronous>, transform_indices = @transform_2, window_bounds = array<i64: 128, 128>}, {pipeline_mode = #tpu.pipeline_mode<synchronous>, transform_indices = @transform_3, window_bounds = array<i64: 128, 128>}, {pipeline_mode = #tpu.pipeline_mode<synchronous>, transform_indices = @transform_4, window_bounds = array<i64: 128, 128>}]} {
    %c0 = arith.constant 0 : index
    %c0_0 = arith.constant 0 : index
    %0 = vector.load %arg1[%c0, %c0_0] : memref<128x128xbf16, #tpu.memory_space<vmem>>, vector<128x128xbf16>
    %c0_1 = arith.constant 0 : index
    %c0_2 = arith.constant 0 : index
    %1 = vector.load %arg2[%c0_1, %c0_2] : memref<128x128xbf16, #tpu.memory_space<vmem>>, vector<128x128xbf16>
    %c0_3 = arith.constant 0 : index
    %c0_4 = arith.constant 0 : index
    %2 = vector.load %arg3[%c0_3, %c0_4] : memref<128x128xbf16, #tpu.memory_space<vmem>>, vector<128x128xbf16>
    %cst = arith.constant dense<0.000000e+00> : vector<128x128xf32>
    %3 = tpu.matmul %1, %2, %cst {dimension_numbers = #tpu.dot_dimension_numbers<[1], [0], [0], [1], [0, 0, 1, 1], [], []>} : vector<128x128xbf16>, vector<128x128xbf16>, vector<128x128xf32> -> vector<128x128xf32>
    %4 = arith.truncf %3 : vector<128x128xf32> to vector<128x128xbf16>
    %cst_5 = arith.constant dense<0.000000e+00> : vector<128x128xf32>
    %5 = tpu.matmul %0, %4, %cst_5 {dimension_numbers = #tpu.dot_dimension_numbers<[1], [0], [0], [1], [0, 0, 1, 1], [], []>} : vector<128x128xbf16>, vector<128x128xbf16>, vector<128x128xf32> -> vector<128x128xf32>
    %cst_6 = arith.constant 0.000000e+00 : f32
    %6 = vector.broadcast %cst_6 : f32 to vector<128x128xf32>
    %7 = arith.cmpf oge, %5, %6 : vector<128x128xf32>
    %cst_7 = arith.constant 3.000000e-01 : f32
    %8 = vector.broadcast %cst_7 : f32 to vector<128x128xf32>
    %9 = arith.mulf %8, %5 : vector<128x128xf32>
    %10 = arith.select %7, %5, %9 : vector<128x128xi1>, vector<128x128xf32>
    %11 = arith.truncf %10 : vector<128x128xf32> to vector<128x128xbf16>
    %c0_8 = arith.constant 0 : index
    %c0_9 = arith.constant 0 : index
    %12 = vector.load %arg4[%c0_8, %c0_9] : memref<128x128xbf16, #tpu.memory_space<vmem>>, vector<128x128xbf16>
    %cst_10 = arith.constant dense<0.000000e+00> : vector<128x128xf32>
    %13 = tpu.matmul %11, %12, %cst_10 {dimension_numbers = #tpu.dot_dimension_numbers<[1], [0], [0], [1], [0, 0, 1, 1], [], []>} : vector<128x128xbf16>, vector<128x128xbf16>, vector<128x128xf32> -> vector<128x128xf32>
    %14 = arith.truncf %13 : vector<128x128xf32> to vector<128x128xbf16>
    %cst_11 = arith.constant dense<0.000000e+00> : vector<128x128xf32>
    %15 = tpu.matmul %0, %14, %cst_11 {dimension_numbers = #tpu.dot_dimension_numbers<[1], [0], [0], [1], [0, 0, 1, 1], [], []>} : vector<128x128xbf16>, vector<128x128xbf16>, vector<128x128xf32> -> vector<128x128xf32>
    %cst_12 = arith.constant 0.000000e+00 : f32
    %16 = vector.broadcast %cst_12 : f32 to vector<128x128xf32>
    %17 = arith.maximumf %15, %16 : vector<128x128xf32>
    %c0_13 = arith.constant 0 : index
    %c0_14 = arith.constant 0 : index
    %18 = vector.load %arg5[%c0_13, %c0_14] : memref<128x128xf32, #tpu.memory_space<vmem>>, vector<128x128xf32>
    tpu.vector_store %arg5[%c0_13, %c0_14], %17 {strides = array<i32>} : memref<128x128xf32, #tpu.memory_space<vmem>>, vector<128x128xf32>,
    return
  }
  func.func @transform_0(%arg0: i32) -> (i32, i32) {
    %c0_i32 = arith.constant 0 : i32
    %c0_i32_0 = arith.constant 0 : i32
    %c0_i32_1 = arith.constant 0 : i32
    return %c0_i32, %c0_i32_0 : i32, i32
  }
  func.func @transform_1(%arg0: i32) -> (i32, i32) {
    %c0_i32 = arith.constant 0 : i32
    %c0_i32_0 = arith.constant 0 : i32
    %c0_i32_1 = arith.constant 0 : i32
    return %c0_i32, %c0_i32_0 : i32, i32
  }
  func.func @transform_2(%arg0: i32) -> (i32, i32) {
    %c0_i32 = arith.constant 0 : i32
    %c0_i32_0 = arith.constant 0 : i32
    %c0_i32_1 = arith.constant 0 : i32
    return %c0_i32, %c0_i32_0 : i32, i32
  }
  func.func @transform_3(%arg0: i32) -> (i32, i32) {
    %c0_i32 = arith.constant 0 : i32
    %c0_i32_0 = arith.constant 0 : i32
    %c0_i32_1 = arith.constant 0 : i32
    return %c0_i32, %c0_i32_0 : i32, i32
  }
  func.func @transform_4(%arg0: i32) -> (i32, i32) {
    %c0_i32 = arith.constant 0 : i32
    %c0_i32_0 = arith.constant 0 : i32
    %c0_i32_1 = arith.constant 0 : i32
    return %c0_i32, %c0_i32_0 : i32, i32
  }
}

</mosaic_0001>

<llo_original>
// kernel: tpu_custom_call.1
$region0: #{tpu_custom_call.1}
  #allocation0 [shape = 'u32[]', space=smem, size = 0x4, offset = 0x4, fixed_abs, tag = 'smem constant byte address 0x4 - core index']
  #allocation1 [shape = 'u32[144,128]{1,0:T(1,128)}', space=vmem, size = 0x12000, scoped, tag = 'internal scratch']
  %s0 = inlined_call_operand.hbm [shape: bf16[128,128], index: 0, kind: input, shape index: {}]
  %s1 = inlined_call_operand.hbm [shape: bf16[128,128], index: 1, kind: input, shape index: {}]
  %s2 = inlined_call_operand.hbm [shape: bf16[128,128], index: 2, kind: input, shape index: {}]
  %s3 = inlined_call_operand.hbm [shape: bf16[128,128], index: 3, kind: input, shape index: {}]
  %s4 = inlined_call_operand.hbm [shape: f32[128,128], index: 4, kind: output, shape index: {}]
  %s5 = sld [smem:[#allocation0]]
  $region42: #{tpu_custom_call.1} parent=0
    _
  %s7 = ssub.s32 1, %s5
  %s8 = scalar_select 0, %s7, %s5
  $region1: #{tpu_custom_call.1} parent=0
    #allocation2 [shape = 'u8[32768]{0}', space=vmem, size = 0x8000, scoped, tag = 'input window, operand 0, single buffered']
    #allocation3 [shape = 's32[1]{0}', space=sflag, size = 0x4, scoped, tag = 'scoped memory for tpu_custom_call.1']
    #allocation4 [shape = 's32[1]{0}', space=sflag, size = 0x4, scoped, tag = 'scoped memory for tpu_custom_call.1']
    #allocation5 [shape = 'u8[32768]{0}', space=vmem, size = 0x8000, scoped, tag = 'input window, operand 1, single buffered']
    #allocation6 [shape = 's32[1]{0}', space=sflag, size = 0x4, scoped, tag = 'scoped memory for tpu_custom_call.1']
    #allocation7 [shape = 'u8[32768]{0}', space=vmem, size = 0x8000, scoped, tag = 'input window, operand 2, single buffered']
    #allocation8 [shape = 'u8[32768]{0}', space=vmem, size = 0x8000, scoped, tag = 'input window, operand 3, single buffered']
    #allocation9 [shape = 's32[1]{0}', space=sflag, size = 0x4, scoped, tag = 'scoped memory for tpu_custom_call.1']
    #allocation10 [shape = 'u8[65536]{0}', space=vmem, size = 0x10000, scoped, tag = 'output window, operand 0, single buffered']
    %9 = vsyncpa [#allocation3], 0
    %10 = vsyncpa [#allocation6], 0
    %11 = vsyncpa [#allocation9], 0
    %12 = vsyncpa [#allocation4], 0
    // Predicated region
    $region2: #{tpu_custom_call.1} parent=1 // pred_check
      _
    $region3: #{tpu_custom_call.1} parent=1 // pred_check_branch
      %14 = sbr.rel (0) target = $region5
    $region4: #{tpu_custom_call.1} parent=1 // pred_region
      %s16 = ssub.s32 1024, 1024
      %17 = vsyncadd [#allocation3], %s16
      %s18 = sshll.u32 [#allocation2], 4
      %s19 = int_to_ptr.vmem [resolvable:$true] %s18
      %24 = dma.hbm_to_vmem [thread:$0]  %s0, 1024, %s19, [#allocation3], 64, 64, 4
    $region5: #{tpu_custom_call.1} parent=1 // pred_fallthru
      _
    // Predicated region
    $region6: #{tpu_custom_call.1} parent=1 // pred_check
      _
    $region7: #{tpu_custom_call.1} parent=1 // pred_check_branch
      %26 = sbr.rel (0) target = $region9
    $region8: #{tpu_custom_call.1} parent=1 // pred_region
      %s28 = ssub.s32 1024, 1024
      %29 = vsyncadd [#allocation6], %s28
      %s30 = sshll.u32 [#allocation5], 4
      %s31 = int_to_ptr.vmem [resolvable:$true] %s30
      %36 = dma.hbm_to_vmem [thread:$0]  %s1, 1024, %s31, [#allocation6], 64, 64, 4
    $region9: #{tpu_custom_call.1} parent=1 // pred_fallthru
      _
    // Predicated region
    $region10: #{tpu_custom_call.1} parent=1 // pred_check
      _
    $region11: #{tpu_custom_call.1} parent=1 // pred_check_branch
      %38 = sbr.rel (0) target = $region13
    $region12: #{tpu_custom_call.1} parent=1 // pred_region
      %s40 = ssub.s32 1024, 1024
      %41 = vsyncadd [#allocation6], %s40
      %s42 = sshll.u32 [#allocation7], 4
      %s43 = int_to_ptr.vmem [resolvable:$true] %s42
      %48 = dma.hbm_to_vmem [thread:$0]  %s2, 1024, %s43, [#allocation6], 64, 64, 4
    $region13: #{tpu_custom_call.1} parent=1 // pred_fallthru
      _
    // Predicated region
    $region14: #{tpu_custom_call.1} parent=1 // pred_check
      _
    $region15: #{tpu_custom_call.1} parent=1 // pred_check_branch
      %50 = sbr.rel (0) target = $region17
    $region16: #{tpu_custom_call.1} parent=1 // pred_region
      %s52 = ssub.s32 1024, 1024
      %53 = vsyncadd [#allocation9], %s52
      %s54 = sshll.u32 [#allocation8], 4
      %s55 = int_to_ptr.vmem [resolvable:$true] %s54
      %60 = dma.hbm_to_vmem [thread:$0]  %s3, 1024, %s55, [#allocation9], 64, 64, 4
    $region17: #{tpu_custom_call.1} parent=1 // pred_fallthru
      _
    // Predicated region
    $region18: #{tpu_custom_call.1} parent=1 // pred_check
      _
    $region19: #{tpu_custom_call.1} parent=1 // pred_check_branch
      %62 = sbr.rel (0) target = $region21
    $region20: #{tpu_custom_call.1} parent=1 // pred_region
      %63 = dma.done [#allocation3], 1024
    $region21: #{tpu_custom_call.1} parent=1 // pred_fallthru
      _
    // Predicated region
    $region22: #{tpu_custom_call.1} parent=1 // pred_check
      _
    $region23: #{tpu_custom_call.1} parent=1 // pred_check_branch
      %65 = sbr.rel (0) target = $region25
    $region24: #{tpu_custom_call.1} parent=1 // pred_region
      %66 = dma.done [#allocation6], 1024
    $region25: #{tpu_custom_call.1} parent=1 // pred_fallthru
      _
    // Predicated region
    $region26: #{tpu_custom_call.1} parent=1 // pred_check
      _
    $region27: #{tpu_custom_call.1} parent=1 // pred_check_branch
      %68 = sbr.rel (0) target = $region29
    $region28: #{tpu_custom_call.1} parent=1 // pred_region
      %69 = dma.done [#allocation6], 1024
    $region29: #{tpu_custom_call.1} parent=1 // pred_fallthru
      _
    // Predicated region
    $region30: #{tpu_custom_call.1} parent=1 // pred_check
      _
    $region31: #{tpu_custom_call.1} parent=1 // pred_check_branch
      %71 = sbr.rel (0) target = $region33
    $region32: #{tpu_custom_call.1} parent=1 // pred_region
      %72 = dma.done [#allocation9], 1024
    $region33: #{tpu_custom_call.1} parent=1 // pred_fallthru
      _
    %v74 = vld [vmem:[#allocation2] sm:$0xf]
    %v75 = vld [vmem:[#allocation2 + $0x4] sm:$0xf]
    %v76 = vld [vmem:[#allocation2 + $0x8] sm:$0xf]
    %v77 = vld [vmem:[#allocation2 + $0xc] sm:$0xf]
    %v78 = vld [vmem:[#allocation2 + $0x10] sm:$0xf]
    %v79 = vld [vmem:[#allocation2 + $0x14] sm:$0xf]
    %v80 = vld [vmem:[#allocation2 + $0x18] sm:$0xf]
    %v81 = vld [vmem:[#allocation2 + $0x1c] sm:$0xf]
    %v82 = vld [vmem:[#allocation2 + $0x20] sm:$0xf]
    %v83 = vld [vmem:[#allocation2 + $0x24] sm:$0xf]
    %v84 = vld [vmem:[#allocation2 + $0x28] sm:$0xf]
    %v85 = vld [vmem:[#allocation2 + $0x2c] sm:$0xf]
    %v86 = vld [vmem:[#allocation2 + $0x30] sm:$0xf]
    %v87 = vld [vmem:[#allocation2 + $0x34] sm:$0xf]
    %v88 = vld [vmem:[#allocation2 + $0x38] sm:$0xf]
    %v89 = vld [vmem:[#allocation2 + $0x3c] sm:$0xf]
    %v90 = vld [vmem:[#allocation5] sm:$0xf]
    %v91 = vld [vmem:[#allocation5 + $0x4] sm:$0xf]
    %v92 = vld [vmem:[#allocation5 + $0x8] sm:$0xf]
    %v93 = vld [vmem:[#allocation5 + $0xc] sm:$0xf]
    %v94 = vld [vmem:[#allocation5 + $0x10] sm:$0xf]
    %v95 = vld [vmem:[#allocation5 + $0x14] sm:$0xf]
    %v96 = vld [vmem:[#allocation5 + $0x18] sm:$0xf]
    %v97 = vld [vmem:[#allocation5 + $0x1c] sm:$0xf]
    %v98 = vld [vmem:[#allocation5 + $0x20] sm:$0xf]
    %v99 = vld [vmem:[#allocation5 + $0x24] sm:$0xf]
    %v100 = vld [vmem:[#allocation5 + $0x28] sm:$0xf]
    %v101 = vld [vmem:[#allocation5 + $0x2c] sm:$0xf]
    %v102 = vld [vmem:[#allocation5 + $0x30] sm:$0xf]
    %v103 = vld [vmem:[#allocation5 + $0x34] sm:$0xf]
    %v104 = vld [vmem:[#allocation5 + $0x38] sm:$0xf]
    %v105 = vld [vmem:[#allocation5 + $0x3c] sm:$0xf]
    %v106 = vld [vmem:[#allocation7] sm:$0xf]
    %v107 = vld [vmem:[#allocation7 + $0x4] sm:$0xf]
    %v108 = vld [vmem:[#allocation7 + $0x8] sm:$0xf]
    %v109 = vld [vmem:[#allocation7 + $0xc] sm:$0xf]
    %v110 = vld [vmem:[#allocation7 + $0x10] sm:$0xf]
    %v111 = vld [vmem:[#allocation7 + $0x14] sm:$0xf]
    %v112 = vld [vmem:[#allocation7 + $0x18] sm:$0xf]
    %v113 = vld [vmem:[#allocation7 + $0x1c] sm:$0xf]
    %v114 = vld [vmem:[#allocation7 + $0x20] sm:$0xf]
    %v115 = vld [vmem:[#allocation7 + $0x24] sm:$0xf]
    %v116 = vld [vmem:[#allocation7 + $0x28] sm:$0xf]
    %v117 = vld [vmem:[#allocation7 + $0x2c] sm:$0xf]
    %v118 = vld [vmem:[#allocation7 + $0x30] sm:$0xf]
    %v119 = vld [vmem:[#allocation7 + $0x34] sm:$0xf]
    %v120 = vld [vmem:[#allocation7 + $0x38] sm:$0xf]
    %v121 = vld [vmem:[#allocation7 + $0x3c] sm:$0xf]
    %v138 = vunpack.c.l.b16 %v90
    %v139 = vunpack.c.l.b16 %v91
    %v140 = vunpack.c.l.b16 %v92
    %v141 = vunpack.c.l.b16 %v93
    %v142 = vunpack.c.l.b16 %v94
    %v143 = vunpack.c.l.b16 %v95
    %v144 = vunpack.c.l.b16 %v96
    %v145 = vunpack.c.l.b16 %v97
    %v146 = vunpack.c.l.b16 %v98
    %v147 = vunpack.c.l.b16 %v99
    %v148 = vunpack.c.l.b16 %v100
    %v149 = vunpack.c.l.b16 %v101
    %v150 = vunpack.c.l.b16 %v102
    %v151 = vunpack.c.l.b16 %v103
    %v152 = vunpack.c.l.b16 %v104
    %v153 = vunpack.c.l.b16 %v105
    %v154 = vpack.c.b16 %v139, %v138
    %v155 = vpack.c.b16 %v141, %v140
    %v156 = vpack.c.b16 %v143, %v142
    %v157 = vpack.c.b16 %v145, %v144
    %v158 = vpack.c.b16 %v147, %v146
    %v159 = vpack.c.b16 %v149, %v148
    %v160 = vpack.c.b16 %v151, %v150
    %v161 = vpack.c.b16 %v153, %v152
    %v186 = vunpack.c.l.b16 %v106
    %v187 = vunpack.c.l.b16 %v107
    %v188 = vunpack.c.l.b16 %v108
    %v189 = vunpack.c.l.b16 %v109
    %v190 = vunpack.c.l.b16 %v110
    %v191 = vunpack.c.l.b16 %v111
    %v192 = vunpack.c.l.b16 %v112
    %v193 = vunpack.c.l.b16 %v113
    %v194 = vunpack.c.l.b16 %v114
    %v195 = vunpack.c.l.b16 %v115
    %v196 = vunpack.c.l.b16 %v116
    %v197 = vunpack.c.l.b16 %v117
    %v198 = vunpack.c.l.b16 %v118
    %v199 = vunpack.c.l.b16 %v119
    %v200 = vunpack.c.l.b16 %v120
    %v201 = vunpack.c.l.b16 %v121
    %v202 = vpack.c.b16 %v187, %v186
    %v203 = vpack.c.b16 %v189, %v188
    %v204 = vpack.c.b16 %v191, %v190
    %v205 = vpack.c.b16 %v193, %v192
    %v206 = vpack.c.b16 %v195, %v194
    %v207 = vpack.c.b16 %v197, %v196
    %v208 = vpack.c.b16 %v199, %v198
    %v209 = vpack.c.b16 %v201, %v200
    %218 = vmatprep.subr.bf16.mxu0 0
    %219 = vmatpush1.bf16.msra.mxu0 %v202
    %220 = vmatprep.subr.bf16.mxu0 0
    %221 = vmatpush1.bf16.msra.mxu0 %v203
    %222 = vmatprep.subr.bf16.mxu0 0
    %223 = vmatpush1.bf16.msra.mxu0 %v204
    %224 = vmatprep.subr.bf16.mxu0 0
    %225 = vmatpush1.bf16.msra.mxu0 %v205
    %226 = vmatprep.subr.bf16.mxu0 0
    %227 = vmatpush1.bf16.msra.mxu0 %v206
    %228 = vmatprep.subr.bf16.mxu0 0
    %229 = vmatpush1.bf16.msra.mxu0 %v207
    %230 = vmatprep.subr.bf16.mxu0 0
    %231 = vmatpush1.bf16.msra.mxu0 %v208
    %232 = vmatprep.subr.bf16.mxu0 0
    %233 = vmatpush1.bf16.msra.mxu0 %v209
    %234 = vmatprep.subr.bf16.mxu0 0
    %235 = vmatpush1.bf16.msra.mxu0 0
    %236 = vmatprep.subr.bf16.mxu0 0
    %237 = vmatpush1.bf16.msra.mxu0 0
    %238 = vmatprep.subr.bf16.mxu0 0
    %239 = vmatpush1.bf16.msra.mxu0 0
    %240 = vmatprep.subr.bf16.mxu0 0
    %241 = vmatpush1.bf16.msra.mxu0 0
    %242 = vmatprep.subr.bf16.mxu0 0
    %243 = vmatpush1.bf16.msra.mxu0 0
    %244 = vmatprep.subr.bf16.mxu0 0
    %245 = vmatpush1.bf16.msra.mxu0 0
    %246 = vmatprep.subr.bf16.mxu0 0
    %247 = vmatpush1.bf16.msra.mxu0 0
    %248 = vmatprep.subr.bf16.mxu0 0
    %249 = vmatpush1.bf16.msra.mxu0 0
    %250 = vmatprep.mubr.bf16.mxu0 0
    %251 = vmatmul.mubr.bf16.gmra.mrb[0].mxu0 %v154
    %v252 = vpop.f32.mrb[0].mxu0
    %v253 = vadd.f32 0.0, %v252
    %v254 = vpop.f32.mrb[0].mxu0
    %v255 = vpop.f32.mrb[0].mxu0
    %v256 = vadd.f32 0.0, %v255
    %v257 = vpop.f32.mrb[0].mxu0
    %258 = vmatprep.mubr.bf16.mxu0 0
    %259 = vmatmul.mubr.bf16.gmra.mrb[0].mxu0 %v155
    %v260 = vpop.f32.mrb[0].mxu0
    %v261 = vadd.f32 0.0, %v260
    %v262 = vpop.f32.mrb[0].mxu0
    %v263 = vpop.f32.mrb[0].mxu0
    %v264 = vadd.f32 0.0, %v263
    %v265 = vpop.f32.mrb[0].mxu0
    %266 = vmatprep.mubr.bf16.mxu0 0
    %267 = vmatmul.mubr.bf16.gmra.mrb[0].mxu0 %v156
    %v268 = vpop.f32.mrb[0].mxu0
    %v269 = vadd.f32 0.0, %v268
    %v270 = vpop.f32.mrb[0].mxu0
    %v271 = vpop.f32.mrb[0].mxu0
    %v272 = vadd.f32 0.0, %v271
    %v273 = vpop.f32.mrb[0].mxu0
    %274 = vmatprep.mubr.bf16.mxu0 0
    %275 = vmatmul.mubr.bf16.gmra.mrb[0].mxu0 %v157
    %v276 = vpop.f32.mrb[0].mxu0
    %v277 = vadd.f32 0.0, %v276
    %v278 = vpop.f32.mrb[0].mxu0
    %v279 = vpop.f32.mrb[0].mxu0
    %v280 = vadd.f32 0.0, %v279
    %v281 = vpop.f32.mrb[0].mxu0
    %282 = vmatprep.mubr.bf16.mxu0 0
    %283 = vmatmul.mubr.bf16.gmra.mrb[0].mxu0 %v158
    %v284 = vpop.f32.mrb[0].mxu0
    %v285 = vadd.f32 0.0, %v284
    %v286 = vpop.f32.mrb[0].mxu0
    %v287 = vpop.f32.mrb[0].mxu0
    %v288 = vadd.f32 0.0, %v287
    %v289 = vpop.f32.mrb[0].mxu0
    %290 = vmatprep.mubr.bf16.mxu0 0
    %291 = vmatmul.mubr.bf16.gmra.mrb[0].mxu0 %v159
    %v292 = vpop.f32.mrb[0].mxu0
    %v293 = vadd.f32 0.0, %v292
    %v294 = vpop.f32.mrb[0].mxu0
    %v295 = vpop.f32.mrb[0].mxu0
    %v296 = vadd.f32 0.0, %v295
    %v297 = vpop.f32.mrb[0].mxu0
    %298 = vmatprep.mubr.bf16.mxu0 0
    %299 = vmatmul.mubr.bf16.gmra.mrb[0].mxu0 %v160
    %v300 = vpop.f32.mrb[0].mxu0
    %v301 = vadd.f32 0.0, %v300
    %v302 = vpop.f32.mrb[0].mxu0
    %v303 = vpop.f32.mrb[0].mxu0
    %v304 = vadd.f32 0.0, %v303
    %v305 = vpop.f32.mrb[0].mxu0
    %306 = vmatprep.mubr.bf16.mxu0 0
    %307 = vmatmul.mubr.bf16.gmra.mrb[0].mxu0 %v161
    %v308 = vpop.f32.mrb[0].mxu0
    %v309 = vadd.f32 0.0, %v308
    %v310 = vpop.f32.mrb[0].mxu0
    %v311 = vpop.f32.mrb[0].mxu0
    %v312 = vadd.f32 0.0, %v311
    %v313 = vpop.f32.mrb[0].mxu0
    %314 = vdwg.mxu0
    %v315 = vpack.c.bf16 %v256, %v253
    %v316 = vpack.c.bf16 %v264, %v261
    %v317 = vpack.c.bf16 %v272, %v269
    %v318 = vpack.c.bf16 %v280, %v277
    %v319 = vpack.c.bf16 %v288, %v285
    %v320 = vpack.c.bf16 %v296, %v293
    %v321 = vpack.c.bf16 %v304, %v301
    %v322 = vpack.c.bf16 %v312, %v309
    %v339 = vunpack.c.l.b16 %v74
    %v340 = vunpack.c.l.b16 %v75
    %v341 = vunpack.c.l.b16 %v76
    %v342 = vunpack.c.l.b16 %v77
    %v343 = vunpack.c.l.b16 %v78
    %v344 = vunpack.c.l.b16 %v79
    %v345 = vunpack.c.l.b16 %v80
    %v346 = vunpack.c.l.b16 %v81
    %v347 = vunpack.c.l.b16 %v82
    %v348 = vunpack.c.l.b16 %v83
    %v349 = vunpack.c.l.b16 %v84
    %v350 = vunpack.c.l.b16 %v85
    %v351 = vunpack.c.l.b16 %v86
    %v352 = vunpack.c.l.b16 %v87
    %v353 = vunpack.c.l.b16 %v88
    %v354 = vunpack.c.l.b16 %v89
    %v355 = vpack.c.b16 %v340, %v339
    %v356 = vpack.c.b16 %v342, %v341
    %v357 = vpack.c.b16 %v344, %v343
    %v358 = vpack.c.b16 %v346, %v345
    %v359 = vpack.c.b16 %v348, %v347
    %v360 = vpack.c.b16 %v350, %v349
    %v361 = vpack.c.b16 %v352, %v351
    %v362 = vpack.c.b16 %v354, %v353
    %371 = vmatprep.subr.bf16.mxu0 0
    %372 = vmatpush1.bf16.msra.mxu0 %v315
    %373 = vmatprep.subr.bf16.mxu0 0
    %374 = vmatpush1.bf16.msra.mxu0 %v316
    %375 = vmatprep.subr.bf16.mxu0 0
    %376 = vmatpush1.bf16.msra.mxu0 %v317
    %377 = vmatprep.subr.bf16.mxu0 0
    %378 = vmatpush1.bf16.msra.mxu0 %v318
    %379 = vmatprep.subr.bf16.mxu0 0
    %380 = vmatpush1.bf16.msra.mxu0 %v319
    %381 = vmatprep.subr.bf16.mxu0 0
    %382 = vmatpush1.bf16.msra.mxu0 %v320
    %383 = vmatprep.subr.bf16.mxu0 0
    %384 = vmatpush1.bf16.msra.mxu0 %v321
    %385 = vmatprep.subr.bf16.mxu0 0
    %386 = vmatpush1.bf16.msra.mxu0 %v322
    %387 = vmatprep.subr.bf16.mxu0 0
    %388 = vmatpush1.bf16.msra.mxu0 0
    %389 = vmatprep.subr.bf16.mxu0 0
    %390 = vmatpush1.bf16.msra.mxu0 0
    %391 = vmatprep.subr.bf16.mxu0 0
    %392 = vmatpush1.bf16.msra.mxu0 0
    %393 = vmatprep.subr.bf16.mxu0 0
    %394 = vmatpush1.bf16.msra.mxu0 0
    %395 = vmatprep.subr.bf16.mxu0 0
    %396 = vmatpush1.bf16.msra.mxu0 0
    %397 = vmatprep.subr.bf16.mxu0 0
    %398 = vmatpush1.bf16.msra.mxu0 0
    %399 = vmatprep.subr.bf16.mxu0 0
    %400 = vmatpush1.bf16.msra.mxu0 0
    %401 = vmatprep.subr.bf16.mxu0 0
    %402 = vmatpush1.bf16.msra.mxu0 0
    %403 = vmatprep.mubr.bf16.mxu0 0
    %404 = vmatmul.mubr.bf16.gmra.mrb[0].mxu0 %v355
    %v405 = vpop.f32.mrb[0].mxu0
    %v406 = vadd.f32 0.0, %v405
    %v407 = vpop.f32.mrb[0].mxu0
    %v408 = vpop.f32.mrb[0].mxu0
    %v409 = vadd.f32 0.0, %v408
    %v410 = vpop.f32.mrb[0].mxu0
    %411 = vmatprep.mubr.bf16.mxu0 0
    %412 = vmatmul.mubr.bf16.gmra.mrb[0].mxu0 %v356
    %v413 = vpop.f32.mrb[0].mxu0
    %v414 = vadd.f32 0.0, %v413
    %v415 = vpop.f32.mrb[0].mxu0
    %v416 = vpop.f32.mrb[0].mxu0
    %v417 = vadd.f32 0.0, %v416
    %v418 = vpop.f32.mrb[0].mxu0
    %419 = vmatprep.mubr.bf16.mxu0 0
    %420 = vmatmul.mubr.bf16.gmra.mrb[0].mxu0 %v357
    %v421 = vpop.f32.mrb[0].mxu0
    %v422 = vadd.f32 0.0, %v421
    %v423 = vpop.f32.mrb[0].mxu0
    %v424 = vpop.f32.mrb[0].mxu0
    %v425 = vadd.f32 0.0, %v424
    %v426 = vpop.f32.mrb[0].mxu0
    %427 = vmatprep.mubr.bf16.mxu0 0
    %428 = vmatmul.mubr.bf16.gmra.mrb[0].mxu0 %v358
    %v429 = vpop.f32.mrb[0].mxu0
    %v430 = vadd.f32 0.0, %v429
    %v431 = vpop.f32.mrb[0].mxu0
    %v432 = vpop.f32.mrb[0].mxu0
    %v433 = vadd.f32 0.0, %v432
    %v434 = vpop.f32.mrb[0].mxu0
    %435 = vmatprep.mubr.bf16.mxu0 0
    %436 = vmatmul.mubr.bf16.gmra.mrb[0].mxu0 %v359
    %v437 = vpop.f32.mrb[0].mxu0
    %v438 = vadd.f32 0.0, %v437
    %v439 = vpop.f32.mrb[0].mxu0
    %v440 = vpop.f32.mrb[0].mxu0
    %v441 = vadd.f32 0.0, %v440
    %v442 = vpop.f32.mrb[0].mxu0
    %443 = vmatprep.mubr.bf16.mxu0 0
    %444 = vmatmul.mubr.bf16.gmra.mrb[0].mxu0 %v360
    %v445 = vpop.f32.mrb[0].mxu0
    %v446 = vadd.f32 0.0, %v445
    %v447 = vpop.f32.mrb[0].mxu0
    %v448 = vpop.f32.mrb[0].mxu0
    %v449 = vadd.f32 0.0, %v448
    %v450 = vpop.f32.mrb[0].mxu0
    %451 = vmatprep.mubr.bf16.mxu0 0
    %452 = vmatmul.mubr.bf16.gmra.mrb[0].mxu0 %v361
    %v453 = vpop.f32.mrb[0].mxu0
    %v454 = vadd.f32 0.0, %v453
    %v455 = vpop.f32.mrb[0].mxu0
    %v456 = vpop.f32.mrb[0].mxu0
    %v457 = vadd.f32 0.0, %v456
    %v458 = vpop.f32.mrb[0].mxu0
    %459 = vmatprep.mubr.bf16.mxu0 0
    %460 = vmatmul.mubr.bf16.gmra.mrb[0].mxu0 %v362
    %v461 = vpop.f32.mrb[0].mxu0
    %v462 = vadd.f32 0.0, %v461
    %v463 = vpop.f32.mrb[0].mxu0
    %v464 = vpop.f32.mrb[0].mxu0
    %v465 = vadd.f32 0.0, %v464
    %v466 = vpop.f32.mrb[0].mxu0
    %467 = vdwg.mxu0
    %vm468 = vcmp.ge.f32.partialorder %v406, 0.0
    %vm469 = vcmp.ge.f32.partialorder %v409, 0.0
    %vm470 = vcmp.ge.f32.partialorder %v414, 0.0
    %vm471 = vcmp.ge.f32.partialorder %v417, 0.0
    %vm472 = vcmp.ge.f32.partialorder %v422, 0.0
    %vm473 = vcmp.ge.f32.partialorder %v425, 0.0
    %vm474 = vcmp.ge.f32.partialorder %v430, 0.0
    %vm475 = vcmp.ge.f32.partialorder %v433, 0.0
    %vm476 = vcmp.ge.f32.partialorder %v438, 0.0
    %vm477 = vcmp.ge.f32.partialorder %v441, 0.0
    %vm478 = vcmp.ge.f32.partialorder %v446, 0.0
    %vm479 = vcmp.ge.f32.partialorder %v449, 0.0
    %vm480 = vcmp.ge.f32.partialorder %v454, 0.0
    %vm481 = vcmp.ge.f32.partialorder %v457, 0.0
    %vm482 = vcmp.ge.f32.partialorder %v462, 0.0
    %vm483 = vcmp.ge.f32.partialorder %v465, 0.0
    %v484 = vmul.f32 %v406, 0.3
    %v485 = vmul.f32 %v409, 0.3
    %v486 = vmul.f32 %v414, 0.3
    %v487 = vmul.f32 %v417, 0.3
    %v488 = vmul.f32 %v422, 0.3
    %v489 = vmul.f32 %v425, 0.3
    %v490 = vmul.f32 %v430, 0.3
    %v491 = vmul.f32 %v433, 0.3
    %v492 = vmul.f32 %v438, 0.3
    %v493 = vmul.f32 %v441, 0.3
    %v494 = vmul.f32 %v446, 0.3
    %v495 = vmul.f32 %v449, 0.3
    %v496 = vmul.f32 %v454, 0.3
    %v497 = vmul.f32 %v457, 0.3
    %v498 = vmul.f32 %v462, 0.3
    %v499 = vmul.f32 %v465, 0.3
    %v500 = vsel %vm468, %v406, %v484
    %v501 = vsel %vm469, %v409, %v485
    %v502 = vsel %vm470, %v414, %v486
    %v503 = vsel %vm471, %v417, %v487
    %v504 = vsel %vm472, %v422, %v488
    %v505 = vsel %vm473, %v425, %v489
    %v506 = vsel %vm474, %v430, %v490
    %v507 = vsel %vm475, %v433, %v491
    %v508 = vsel %vm476, %v438, %v492
    %v509 = vsel %vm477, %v441, %v493
    %v510 = vsel %vm478, %v446, %v494
    %v511 = vsel %vm479, %v449, %v495
    %v512 = vsel %vm480, %v454, %v496
    %v513 = vsel %vm481, %v457, %v497
    %v514 = vsel %vm482, %v462, %v498
    %v515 = vsel %vm483, %v465, %v499
    %v516 = vpack.c.bf16 %v501, %v500
    %v517 = vpack.c.bf16 %v503, %v502
    %v518 = vpack.c.bf16 %v505, %v504
    %v519 = vpack.c.bf16 %v507, %v506
    %v520 = vpack.c.bf16 %v509, %v508
    %v521 = vpack.c.bf16 %v511, %v510
    %v522 = vpack.c.bf16 %v513, %v512
    %v523 = vpack.c.bf16 %v515, %v514
    %v524 = vld [vmem:[#allocation8] sm:$0xf]
    %v525 = vld [vmem:[#allocation8 + $0x4] sm:$0xf]
    %v526 = vld [vmem:[#allocation8 + $0x8] sm:$0xf]
    %v527 = vld [vmem:[#allocation8 + $0xc] sm:$0xf]
    %v528 = vld [vmem:[#allocation8 + $0x10] sm:$0xf]
    %v529 = vld [vmem:[#allocation8 + $0x14] sm:$0xf]
    %v530 = vld [vmem:[#allocation8 + $0x18] sm:$0xf]
    %v531 = vld [vmem:[#allocation8 + $0x1c] sm:$0xf]
    %v532 = vld [vmem:[#allocation8 + $0x20] sm:$0xf]
    %v533 = vld [vmem:[#allocation8 + $0x24] sm:$0xf]
    %v534 = vld [vmem:[#allocation8 + $0x28] sm:$0xf]
    %v535 = vld [vmem:[#allocation8 + $0x2c] sm:$0xf]
    %v536 = vld [vmem:[#allocation8 + $0x30] sm:$0xf]
    %v537 = vld [vmem:[#allocation8 + $0x34] sm:$0xf]
    %v538 = vld [vmem:[#allocation8 + $0x38] sm:$0xf]
    %v539 = vld [vmem:[#allocation8 + $0x3c] sm:$0xf]
    %v556 = vunpack.c.l.b16 %v524
    %v557 = vunpack.c.l.b16 %v525
    %v558 = vunpack.c.l.b16 %v526
    %v559 = vunpack.c.l.b16 %v527
    %v560 = vunpack.c.l.b16 %v528
    %v561 = vunpack.c.l.b16 %v529
    %v562 = vunpack.c.l.b16 %v530
    %v563 = vunpack.c.l.b16 %v531
    %v564 = vunpack.c.l.b16 %v532
    %v565 = vunpack.c.l.b16 %v533
    %v566 = vunpack.c.l.b16 %v534
    %v567 = vunpack.c.l.b16 %v535
    %v568 = vunpack.c.l.b16 %v536
    %v569 = vunpack.c.l.b16 %v537
    %v570 = vunpack.c.l.b16 %v538
    %v571 = vunpack.c.l.b16 %v539
    %v572 = vpack.c.b16 %v557, %v556
    %v573 = vpack.c.b16 %v559, %v558
    %v574 = vpack.c.b16 %v561, %v560
    %v575 = vpack.c.b16 %v563, %v562
    %v576 = vpack.c.b16 %v565, %v564
    %v577 = vpack.c.b16 %v567, %v566
    %v578 = vpack.c.b16 %v569, %v568
    %v579 = vpack.c.b16 %v571, %v570
    %588 = vmatprep.subr.bf16.mxu0 0
    %589 = vmatpush1.bf16.msra.mxu0 %v572
    %590 = vmatprep.subr.bf16.mxu0 0
    %591 = vmatpush1.bf16.msra.mxu0 %v573
    %592 = vmatprep.subr.bf16.mxu0 0
    %593 = vmatpush1.bf16.msra.mxu0 %v574
    %594 = vmatprep.subr.bf16.mxu0 0
    %595 = vmatpush1.bf16.msra.mxu0 %v575
    %596 = vmatprep.subr.bf16.mxu0 0
    %597 = vmatpush1.bf16.msra.mxu0 %v576
    %598 = vmatprep.subr.bf16.mxu0 0
    %599 = vmatpush1.bf16.msra.mxu0 %v577
    %600 = vmatprep.subr.bf16.mxu0 0
    %601 = vmatpush1.bf16.msra.mxu0 %v578
    %602 = vmatprep.subr.bf16.mxu0 0
    %603 = vmatpush1.bf16.msra.mxu0 %v579
    %604 = vmatprep.subr.bf16.mxu0 0
    %605 = vmatpush1.bf16.msra.mxu0 0
    %606 = vmatprep.subr.bf16.mxu0 0
    %607 = vmatpush1.bf16.msra.mxu0 0
    %608 = vmatprep.subr.bf16.mxu0 0
    %609 = vmatpush1.bf16.msra.mxu0 0
    %610 = vmatprep.subr.bf16.mxu0 0
    %611 = vmatpush1.bf16.msra.mxu0 0
    %612 = vmatprep.subr.bf16.mxu0 0
    %613 = vmatpush1.bf16.msra.mxu0 0
    %614 = vmatprep.subr.bf16.mxu0 0
    %615 = vmatpush1.bf16.msra.mxu0 0
    %616 = vmatprep.subr.bf16.mxu0 0
    %617 = vmatpush1.bf16.msra.mxu0 0
    %618 = vmatprep.subr.bf16.mxu0 0
    %619 = vmatpush1.bf16.msra.mxu0 0
    %620 = vmatprep.mubr.bf16.mxu0 0
    %621 = vmatmul.mubr.bf16.gmra.mrb[0].mxu0 %v516
    %v622 = vpop.f32.mrb[0].mxu0
    %v623 = vadd.f32 0.0, %v622
    %v624 = vpop.f32.mrb[0].mxu0
    %v625 = vpop.f32.mrb[0].mxu0
    %v626 = vadd.f32 0.0, %v625
    %v627 = vpop.f32.mrb[0].mxu0
    %628 = vmatprep.mubr.bf16.mxu0 0
    %629 = vmatmul.mubr.bf16.gmra.mrb[0].mxu0 %v517
    %v630 = vpop.f32.mrb[0].mxu0
    %v631 = vadd.f32 0.0, %v630
    %v632 = vpop.f32.mrb[0].mxu0
    %v633 = vpop.f32.mrb[0].mxu0
    %v634 = vadd.f32 0.0, %v633
    %v635 = vpop.f32.mrb[0].mxu0
    %636 = vmatprep.mubr.bf16.mxu0 0
    %637 = vmatmul.mubr.bf16.gmra.mrb[0].mxu0 %v518
    %v638 = vpop.f32.mrb[0].mxu0
    %v639 = vadd.f32 0.0, %v638
    %v640 = vpop.f32.mrb[0].mxu0
    %v641 = vpop.f32.mrb[0].mxu0
    %v642 = vadd.f32 0.0, %v641
    %v643 = vpop.f32.mrb[0].mxu0
    %644 = vmatprep.mubr.bf16.mxu0 0
    %645 = vmatmul.mubr.bf16.gmra.mrb[0].mxu0 %v519
    %v646 = vpop.f32.mrb[0].mxu0
    %v647 = vadd.f32 0.0, %v646
    %v648 = vpop.f32.mrb[0].mxu0
    %v649 = vpop.f32.mrb[0].mxu0
    %v650 = vadd.f32 0.0, %v649
    %v651 = vpop.f32.mrb[0].mxu0
    %652 = vmatprep.mubr.bf16.mxu0 0
    %653 = vmatmul.mubr.bf16.gmra.mrb[0].mxu0 %v520
    %v654 = vpop.f32.mrb[0].mxu0
    %v655 = vadd.f32 0.0, %v654
    %v656 = vpop.f32.mrb[0].mxu0
    %v657 = vpop.f32.mrb[0].mxu0
    %v658 = vadd.f32 0.0, %v657
    %v659 = vpop.f32.mrb[0].mxu0
    %660 = vmatprep.mubr.bf16.mxu0 0
    %661 = vmatmul.mubr.bf16.gmra.mrb[0].mxu0 %v521
    %v662 = vpop.f32.mrb[0].mxu0
    %v663 = vadd.f32 0.0, %v662
    %v664 = vpop.f32.mrb[0].mxu0
    %v665 = vpop.f32.mrb[0].mxu0
    %v666 = vadd.f32 0.0, %v665
    %v667 = vpop.f32.mrb[0].mxu0
    %668 = vmatprep.mubr.bf16.mxu0 0
    %669 = vmatmul.mubr.bf16.gmra.mrb[0].mxu0 %v522
    %v670 = vpop.f32.mrb[0].mxu0
    %v671 = vadd.f32 0.0, %v670
    %v672 = vpop.f32.mrb[0].mxu0
    %v673 = vpop.f32.mrb[0].mxu0
    %v674 = vadd.f32 0.0, %v673
    %v675 = vpop.f32.mrb[0].mxu0
    %676 = vmatprep.mubr.bf16.mxu0 0
    %677 = vmatmul.mubr.bf16.gmra.mrb[0].mxu0 %v523
    %v678 = vpop.f32.mrb[0].mxu0
    %v679 = vadd.f32 0.0, %v678
    %v680 = vpop.f32.mrb[0].mxu0
    %v681 = vpop.f32.mrb[0].mxu0
    %v682 = vadd.f32 0.0, %v681
    %v683 = vpop.f32.mrb[0].mxu0
    %684 = vdwg.mxu0
    %v685 = vpack.c.bf16 %v626, %v623
    %v686 = vpack.c.bf16 %v634, %v631
    %v687 = vpack.c.bf16 %v642, %v639
    %v688 = vpack.c.bf16 %v650, %v647
    %v689 = vpack.c.bf16 %v658, %v655
    %v690 = vpack.c.bf16 %v666, %v663
    %v691 = vpack.c.bf16 %v674, %v671
    %v692 = vpack.c.bf16 %v682, %v679
    %693 = vmatprep.subr.bf16.mxu0 0
    %694 = vmatpush1.bf16.msra.mxu0 %v685
    %695 = vmatprep.subr.bf16.mxu0 0
    %696 = vmatpush1.bf16.msra.mxu0 %v686
    %697 = vmatprep.subr.bf16.mxu0 0
    %698 = vmatpush1.bf16.msra.mxu0 %v687
    %699 = vmatprep.subr.bf16.mxu0 0
    %700 = vmatpush1.bf16.msra.mxu0 %v688
    %701 = vmatprep.subr.bf16.mxu0 0
    %702 = vmatpush1.bf16.msra.mxu0 %v689
    %703 = vmatprep.subr.bf16.mxu0 0
    %704 = vmatpush1.bf16.msra.mxu0 %v690
    %705 = vmatprep.subr.bf16.mxu0 0
    %706 = vmatpush1.bf16.msra.mxu0 %v691
    %707 = vmatprep.subr.bf16.mxu0 0
    %708 = vmatpush1.bf16.msra.mxu0 %v692
    %709 = vmatprep.subr.bf16.mxu0 0
    %710 = vmatpush1.bf16.msra.mxu0 0
    %711 = vmatprep.subr.bf16.mxu0 0
    %712 = vmatpush1.bf16.msra.mxu0 0
    %713 = vmatprep.subr.bf16.mxu0 0
    %714 = vmatpush1.bf16.msra.mxu0 0
    %715 = vmatprep.subr.bf16.mxu0 0
    %716 = vmatpush1.bf16.msra.mxu0 0
    %717 = vmatprep.subr.bf16.mxu0 0
    %718 = vmatpush1.bf16.msra.mxu0 0
    %719 = vmatprep.subr.bf16.mxu0 0
    %720 = vmatpush1.bf16.msra.mxu0 0
    %721 = vmatprep.subr.bf16.mxu0 0
    %722 = vmatpush1.bf16.msra.mxu0 0
    %723 = vmatprep.subr.bf16.mxu0 0
    %724 = vmatpush1.bf16.msra.mxu0 0
    %725 = vmatprep.mubr.bf16.mxu0 0
    %726 = vmatmul.mubr.bf16.gmra.mrb[0].mxu0 %v355
    %v727 = vpop.f32.mrb[0].mxu0
    %v728 = vadd.f32 0.0, %v727
    %v729 = vpop.f32.mrb[0].mxu0
    %v730 = vpop.f32.mrb[0].mxu0
    %v731 = vadd.f32 0.0, %v730
    %v732 = vpop.f32.mrb[0].mxu0
    %733 = vmatprep.mubr.bf16.mxu0 0
    %734 = vmatmul.mubr.bf16.gmra.mrb[0].mxu0 %v356
    %v735 = vpop.f32.mrb[0].mxu0
    %v736 = vadd.f32 0.0, %v735
    %v737 = vpop.f32.mrb[0].mxu0
    %v738 = vpop.f32.mrb[0].mxu0
    %v739 = vadd.f32 0.0, %v738
    %v740 = vpop.f32.mrb[0].mxu0
    %741 = vmatprep.mubr.bf16.mxu0 0
    %742 = vmatmul.mubr.bf16.gmra.mrb[0].mxu0 %v357
    %v743 = vpop.f32.mrb[0].mxu0
    %v744 = vadd.f32 0.0, %v743
    %v745 = vpop.f32.mrb[0].mxu0
    %v746 = vpop.f32.mrb[0].mxu0
    %v747 = vadd.f32 0.0, %v746
    %v748 = vpop.f32.mrb[0].mxu0
    %749 = vmatprep.mubr.bf16.mxu0 0
    %750 = vmatmul.mubr.bf16.gmra.mrb[0].mxu0 %v358
    %v751 = vpop.f32.mrb[0].mxu0
    %v752 = vadd.f32 0.0, %v751
    %v753 = vpop.f32.mrb[0].mxu0
    %v754 = vpop.f32.mrb[0].mxu0
    %v755 = vadd.f32 0.0, %v754
    %v756 = vpop.f32.mrb[0].mxu0
    %757 = vmatprep.mubr.bf16.mxu0 0
    %758 = vmatmul.mubr.bf16.gmra.mrb[0].mxu0 %v359
    %v759 = vpop.f32.mrb[0].mxu0
    %v760 = vadd.f32 0.0, %v759
    %v761 = vpop.f32.mrb[0].mxu0
    %v762 = vpop.f32.mrb[0].mxu0
    %v763 = vadd.f32 0.0, %v762
    %v764 = vpop.f32.mrb[0].mxu0
    %765 = vmatprep.mubr.bf16.mxu0 0
    %766 = vmatmul.mubr.bf16.gmra.mrb[0].mxu0 %v360
    %v767 = vpop.f32.mrb[0].mxu0
    %v768 = vadd.f32 0.0, %v767
    %v769 = vpop.f32.mrb[0].mxu0
    %v770 = vpop.f32.mrb[0].mxu0
    %v771 = vadd.f32 0.0, %v770
    %v772 = vpop.f32.mrb[0].mxu0
    %773 = vmatprep.mubr.bf16.mxu0 0
    %774 = vmatmul.mubr.bf16.gmra.mrb[0].mxu0 %v361
    %v775 = vpop.f32.mrb[0].mxu0
    %v776 = vadd.f32 0.0, %v775
    %v777 = vpop.f32.mrb[0].mxu0
    %v778 = vpop.f32.mrb[0].mxu0
    %v779 = vadd.f32 0.0, %v778
    %v780 = vpop.f32.mrb[0].mxu0
    %781 = vmatprep.mubr.bf16.mxu0 0
    %782 = vmatmul.mubr.bf16.gmra.mrb[0].mxu0 %v362
    %v783 = vpop.f32.mrb[0].mxu0
    %v784 = vadd.f32 0.0, %v783
    %v785 = vpop.f32.mrb[0].mxu0
    %v786 = vpop.f32.mrb[0].mxu0
    %v787 = vadd.f32 0.0, %v786
    %v788 = vpop.f32.mrb[0].mxu0
    %789 = vdwg.mxu0
    %v790 = vmax.f32 %v728, 0.0
    %v791 = vmax.f32 %v731, 0.0
    %v792 = vmax.f32 %v736, 0.0
    %v793 = vmax.f32 %v739, 0.0
    %v794 = vmax.f32 %v744, 0.0
    %v795 = vmax.f32 %v747, 0.0
    %v796 = vmax.f32 %v752, 0.0
    %v797 = vmax.f32 %v755, 0.0
    %v798 = vmax.f32 %v760, 0.0
    %v799 = vmax.f32 %v763, 0.0
    %v800 = vmax.f32 %v768, 0.0
    %v801 = vmax.f32 %v771, 0.0
    %v802 = vmax.f32 %v776, 0.0
    %v803 = vmax.f32 %v779, 0.0
    %v804 = vmax.f32 %v784, 0.0
    %v805 = vmax.f32 %v787, 0.0
    %806 = vst [vmem:[#allocation10] sm:$0xff] %v790
    %807 = vst [vmem:[#allocation10 + $0x8] sm:$0xff] %v791
    %808 = vst [vmem:[#allocation10 + $0x10] sm:$0xff] %v792
    %809 = vst [vmem:[#allocation10 + $0x18] sm:$0xff] %v793
    %810 = vst [vmem:[#allocation10 + $0x20] sm:$0xff] %v794
    %811 = vst [vmem:[#allocation10 + $0x28] sm:$0xff] %v795
    %812 = vst [vmem:[#allocation10 + $0x30] sm:$0xff] %v796
    %813 = vst [vmem:[#allocation10 + $0x38] sm:$0xff] %v797
    %814 = vst [vmem:[#allocation10 + $0x40] sm:$0xff] %v798
    %815 = vst [vmem:[#allocation10 + $0x48] sm:$0xff] %v799
    %816 = vst [vmem:[#allocation10 + $0x50] sm:$0xff] %v800
    %817 = vst [vmem:[#allocation10 + $0x58] sm:$0xff] %v801
    %818 = vst [vmem:[#allocation10 + $0x60] sm:$0xff] %v802
    %819 = vst [vmem:[#allocation10 + $0x68] sm:$0xff] %v803
    %820 = vst [vmem:[#allocation10 + $0x70] sm:$0xff] %v804
    %821 = vst [vmem:[#allocation10 + $0x78] sm:$0xff] %v805
    // Predicated region
    $region34: #{tpu_custom_call.1} parent=1 // pred_check
      _
    $region35: #{tpu_custom_call.1} parent=1 // pred_check_branch
      %823 = sbr.rel (0) target = $region37
    $region36: #{tpu_custom_call.1} parent=1 // pred_region
      %s825 = ssub.s32 2048, 2048
      %826 = vsyncadd [#allocation4], %s825
      %s827 = sshll.u32 [#allocation10], 4
      %s828 = int_to_ptr.vmem [resolvable:$true] %s827
      %833 = dma.vmem_to_hbm [thread:$0]  %s828, 2048, %s4, [#allocation4], 128, 128, 8
    $region37: #{tpu_custom_call.1} parent=1 // pred_fallthru
      _
    // Predicated region
    $region38: #{tpu_custom_call.1} parent=1 // pred_check
      _
    $region39: #{tpu_custom_call.1} parent=1 // pred_check_branch
      %835 = sbr.rel (0) target = $region41
    $region40: #{tpu_custom_call.1} parent=1 // pred_region
      %836 = dma.done [#allocation4], 2048
    $region41: #{tpu_custom_call.1} parent=1 // pred_fallthru
      _
    %837 = vsyncpa [#allocation3], 1
    %838 = vsyncpa [#allocation6], 1
    %839 = vsyncpa [#allocation9], 1
    %840 = vsyncpa [#allocation4], 1

</llo_original>
